<compile_context>
chip_gen: v5e
topology: v5e:2x2
jax: 0.10.0
libtpu: 0.0.40
codegen_flags: <defaults>
</compile_context>

<pallas_src>
import functools

import jax
import jax.numpy as jnp
from jax.experimental import pallas as pl
from jax.experimental.pallas import tpu as pltpu


def _birnn_fused_kernel(xs_ref, wih_ref, whh_ref, b_ref, o_ref, pre_scr, *, T, B):
    """Fused bidirectional Elman RNN, fwd & rev recurrences stacked along batch.

    xs_ref:  (T*2B, D)  stacked input: rows [t*2B : t*2B+B] = x[t] (forward),
                        rows [t*2B+B : (t+1)*2B] = x[T-1-t] (reverse); built in wrapper.
    wih_ref: (D, H)     input->hidden weights (shared by both directions, bf16)
    whh_ref: (H, H)     hidden->hidden weights (shared by both directions, bf16)
    b_ref:   (1, H)     bias (float32)
    o_ref:   (T*B, 2H)  fused output: cols [0:H] forward, cols [H:2H] reverse
    pre_scr: (T*2B, H)  f32 scratch: hoisted input projection (x_stacked @ W_ih + b)
    """
    H = wih_ref.shape[1]
    cdtype = whh_ref.dtype

    # ---- Phase 1: hoisted input projection, one big MXU matmul, bias folded in. ----
    pre_scr[...] = (
        jnp.dot(xs_ref[...], wih_ref[...], preferred_element_type=jnp.float32)
        + b_ref[...]
    )

    # ---- Phase 2: fused fwd+rev recurrence; one (2B,H)x(H,H) MXU matmul per step. ----
    whh = whh_ref[...]  # loop-invariant weight load, hoisted out of the recurrence
    h = jnp.zeros((2 * B, H), jnp.float32)  # [h_fwd; h_rev] carried in vregs
    for t in range(T):  # T is small & static -> fully unrolled, all addresses static
        rt = T - 1 - t
        hh = jnp.dot(h.astype(cdtype), whh, preferred_element_type=jnp.float32)
        pre_t = pre_scr[t * 2 * B:(t + 1) * 2 * B, :]  # contiguous stacked (2B, H) slice
        h = jnp.tanh(hh + pre_t)
        # out[t][:, 0:H]      = forward hidden after step t
        # out[T-1-t][:, H:2H] = reverse hidden after step t  (== tuo[t] placed at T-1-t)
        o_ref[t * B:(t + 1) * B, 0:H] = h[:B].astype(o_ref.dtype)
        o_ref[rt * B:(rt + 1) * B, H:] = h[B:].astype(o_ref.dtype)


@functools.partial(jax.jit, static_argnames=("compute_dtype",))
def bidirectional_forward(x, w_ih, w_hh, b, compute_dtype=jnp.bfloat16):
    """Equivalent of BidirectionalModule.forward, returned as a stacked (T, B, 2H) array.

    (The module returns a Python list of T tensors of shape (B, 2H); that list is just
    `list(result)` of this array — unstacking is kept outside the kernel.)
    Note: both directions intentionally share W_ih / W_hh / b, exactly like the wrapper
    calling the same inner module on the flipped input. Inputs are cast to bf16 for the
    MXU (f32 accumulation), so results match a bf16 reference, not bit-parity with fp32
    PyTorch. Layout assumes B % 8 == 0 and 2H % 128 == 0 for dense tiles; other shapes
    stay correct but incur masked copies.
    """
    T, B, D = x.shape
    H = w_ih.shape[1]

    # Pre-stack forward & reverse inputs: (T, 2B, D); rows [0:B]=x[t], [B:2B]=x[T-1-t].
    # Pure layout plumbing in the wrapper -> no per-step concat inside the kernel.
    x_stacked = jnp.concatenate([x, jnp.flip(x, axis=0)], axis=1)
    xs2d = x_stacked.reshape(T * 2 * B, D).astype(compute_dtype)
    w_ih_c = w_ih.astype(compute_dtype)
    w_hh_c = w_hh.astype(compute_dtype)
    b_c = b.reshape(1, H).astype(jnp.float32)

    kernel = functools.partial(_birnn_fused_kernel, T=T, B=B)
    out2d = pl.pallas_call(
        kernel,
        out_shape=jax.ShapeDtypeStruct((T * B, 2 * H), jnp.float32),
        in_specs=[
            pl.BlockSpec(memory_space=pltpu.MemorySpace.VMEM),  # x_stacked (T*2B, D)
            pl.BlockSpec(memory_space=pltpu.MemorySpace.VMEM),  # W_ih
            pl.BlockSpec(memory_space=pltpu.MemorySpace.VMEM),  # W_hh
            pl.BlockSpec(memory_space=pltpu.MemorySpace.VMEM),  # bias
        ],
        out_specs=pl.BlockSpec(memory_space=pltpu.MemorySpace.VMEM),
        scratch_shapes=[
            pltpu.VMEM((T * 2 * B, H), jnp.float32),  # hoisted input projection
        ],
    )(xs2d, w_ih_c, w_hh_c, b_c)

    return out2d.reshape(T, B, 2 * H)


def _rnn_reference(x, w_ih, w_hh, b, compute_dtype):
    """Pure-JAX Elman RNN mirroring the kernel's precision (bf16 matmuls, f32 accum)."""
    xb = x.astype(compute_dtype)
    wih = w_ih.astype(compute_dtype)
    whh = w_hh.astype(compute_dtype)
    bf = b.astype(jnp.float32)

    def step(h, x_t):
        pre = (
            jnp.dot(x_t, wih, preferred_element_type=jnp.float32)
            + jnp.dot(h.astype(compute_dtype), whh, preferred_element_type=jnp.float32)
            + bf
        )
        h_new = jnp.tanh(pre)
        return h_new, h_new

    h0 = jnp.zeros((x.shape[1], w_ih.shape[1]), jnp.float32)
    _, hs = jax.lax.scan(step, h0, xb)
    return hs


if __name__ == "__main__":
    # Small shapes; H=64 so the fused output last dim (2H = 128) is lane-dense.
    T, B, D, H = 8, 8, 32, 64
    key = jax.random.PRNGKey(0)
    kx, k1, k2, k3 = jax.random.split(key, 4)

    x = jax.random.normal(kx, (T, B, D), dtype=jnp.float32)
    w_ih = jax.random.normal(k1, (D, H), dtype=jnp.float32) * 0.1
    w_hh = jax.random.normal(k2, (H, H), dtype=jnp.float32) * 0.1
    b = jax.random.normal(k3, (1, H), dtype=jnp.float32) * 0.1

    merged = bidirectional_forward(x, w_ih, w_hh, b)  # (T, B, 2H)
    merged = jax.block_until_ready(merged)

    # Correctness check against a pure-JAX reference of the same semantics & precision.
    ref_fwd = _rnn_reference(x, w_ih, w_hh, b, jnp.bfloat16)
    ref_rev = _rnn_reference(jnp.flip(x, axis=0), w_ih, w_hh, b, jnp.bfloat16)
    ref = jnp.concatenate([ref_fwd, jnp.flip(ref_rev, axis=0)], axis=-1)  # (T, B, 2H)

    assert merged.shape == (T, B, 2 * H)
    assert bool(jnp.allclose(merged, ref, atol=2e-3, rtol=2e-3)), (
        "Pallas bidirectional RNN output does not match reference"
    )

    # Module semantics: a list of T tensors of shape (B, 2H).
    outs = [merged[i] for i in range(T)]
    assert outs[0].shape == (B, 2 * H)

    print("KERNEL_OK")
</pallas_src>

<mosaic_0001>
module attributes {stable_mosaic.version = 11 : i64} {
  func.func @_birnn_fused_kernel(%arg0: memref<128x32xbf16, #tpu.memory_space<vmem>>, %arg1: memref<32x64xbf16, #tpu.memory_space<vmem>>, %arg2: memref<64x64xbf16, #tpu.memory_space<vmem>>, %arg3: memref<1x64xf32, #tpu.memory_space<vmem>>, %arg4: memref<64x128xf32, #tpu.memory_space<vmem>>, %arg5: memref<128x64xf32, #tpu.memory_space<vmem>>) attributes {dimension_semantics = [], scalar_prefetch = 0 : i64, scratch_operands = 1 : i64, tpu.core_type = #tpu.core_type<tc>} {
    %c0 = arith.constant 0 : index
    %c0_0 = arith.constant 0 : index
    %0 = vector.load %arg0[%c0, %c0_0] : memref<128x32xbf16, #tpu.memory_space<vmem>>, vector<128x32xbf16>
    %c0_1 = arith.constant 0 : index
    %c0_2 = arith.constant 0 : index
    %1 = vector.load %arg1[%c0_1, %c0_2] : memref<32x64xbf16, #tpu.memory_space<vmem>>, vector<32x64xbf16>
    %cst = arith.constant dense<0.000000e+00> : vector<128x64xf32>
    %2 = tpu.matmul %0, %1, %cst {dimension_numbers = #tpu.dot_dimension_numbers<[1], [0], [0], [1], [0, 0, 1, 1], [], []>} : vector<128x32xbf16>, vector<32x64xbf16>, vector<128x64xf32> -> vector<128x64xf32>
    %c0_3 = arith.constant 0 : index
    %c0_4 = arith.constant 0 : index
    %3 = vector.load %arg3[%c0_3, %c0_4] : memref<1x64xf32, #tpu.memory_space<vmem>>, vector<1x64xf32>
    %4 = vector.broadcast %3 : vector<1x64xf32> to vector<128x64xf32>
    %5 = arith.addf %2, %4 : vector<128x64xf32>
    %c0_5 = arith.constant 0 : index
    %c0_6 = arith.constant 0 : index
    %6 = vector.load %arg5[%c0_5, %c0_6] : memref<128x64xf32, #tpu.memory_space<vmem>>, vector<128x64xf32>
    tpu.vector_store %arg5[%c0_5, %c0_6], %5 {strides = array<i32>} : memref<128x64xf32, #tpu.memory_space<vmem>>, vector<128x64xf32>,
    %c0_7 = arith.constant 0 : index
    %c0_8 = arith.constant 0 : index
    %7 = vector.load %arg2[%c0_7, %c0_8] : memref<64x64xbf16, #tpu.memory_space<vmem>>, vector<64x64xbf16>
    %cst_9 = arith.constant 0.000000e+00 : f32
    %8 = vector.broadcast %cst_9 : f32 to vector<16x64xf32>
    %9 = arith.truncf %8 : vector<16x64xf32> to vector<16x64xbf16>
    %cst_10 = arith.constant dense<0.000000e+00> : vector<16x64xf32>
    %10 = tpu.matmul %9, %7, %cst_10 {dimension_numbers = #tpu.dot_dimension_numbers<[1], [0], [0], [1], [0, 0, 1, 1], [], []>} : vector<16x64xbf16>, vector<64x64xbf16>, vector<16x64xf32> -> vector<16x64xf32>
    %c0_11 = arith.constant 0 : index
    %c0_12 = arith.constant 0 : index
    %11 = vector.load %arg5[%c0_11, %c0_12] : memref<128x64xf32, #tpu.memory_space<vmem>>, vector<16x64xf32>
    %12 = arith.addf %10, %11 : vector<16x64xf32>
    %13 = math.tanh %12 : vector<16x64xf32>
    %14 = vector.extract_strided_slice %13 {offsets = [0, 0], sizes = [8, 64], strides = [1, 1]} : vector<16x64xf32> to vector<8x64xf32>
    %c0_13 = arith.constant 0 : index
    %c0_14 = arith.constant 0 : index
    %15 = vector.load %arg4[%c0_13, %c0_14] : memref<64x128xf32, #tpu.memory_space<vmem>>, vector<8x64xf32>
    tpu.vector_store %arg4[%c0_13, %c0_14], %14 {strides = array<i32>} : memref<64x128xf32, #tpu.memory_space<vmem>>, vector<8x64xf32>,
    %16 = vector.extract_strided_slice %13 {offsets = [8, 0], sizes = [8, 64], strides = [1, 1]} : vector<16x64xf32> to vector<8x64xf32>
    %c56 = arith.constant 56 : index
    %c64 = arith.constant 64 : index
    %17 = vector.load %arg4[%c56, %c64] : memref<64x128xf32, #tpu.memory_space<vmem>>, vector<8x64xf32>
    tpu.vector_store %arg4[%c56, %c64], %16 {strides = array<i32>} : memref<64x128xf32, #tpu.memory_space<vmem>>, vector<8x64xf32>,
    %18 = arith.truncf %13 : vector<16x64xf32> to vector<16x64xbf16>
    %cst_15 = arith.constant dense<0.000000e+00> : vector<16x64xf32>
    %19 = tpu.matmul %18, %7, %cst_15 {dimension_numbers = #tpu.dot_dimension_numbers<[1], [0], [0], [1], [0, 0, 1, 1], [], []>} : vector<16x64xbf16>, vector<64x64xbf16>, vector<16x64xf32> -> vector<16x64xf32>
    %c16 = arith.constant 16 : index
    %c0_16 = arith.constant 0 : index
    %20 = vector.load %arg5[%c16, %c0_16] : memref<128x64xf32, #tpu.memory_space<vmem>>, vector<16x64xf32>
    %21 = arith.addf %19, %20 : vector<16x64xf32>
    %22 = math.tanh %21 : vector<16x64xf32>
    %23 = vector.extract_strided_slice %22 {offsets = [0, 0], sizes = [8, 64], strides = [1, 1]} : vector<16x64xf32> to vector<8x64xf32>
    %c8 = arith.constant 8 : index
    %c0_17 = arith.constant 0 : index
    %24 = vector.load %arg4[%c8, %c0_17] : memref<64x128xf32, #tpu.memory_space<vmem>>, vector<8x64xf32>
    tpu.vector_store %arg4[%c8, %c0_17], %23 {strides = array<i32>} : memref<64x128xf32, #tpu.memory_space<vmem>>, vector<8x64xf32>,
    %25 = vector.extract_strided_slice %22 {offsets = [8, 0], sizes = [8, 64], strides = [1, 1]} : vector<16x64xf32> to vector<8x64xf32>
    %c48 = arith.constant 48 : index
    %c64_18 = arith.constant 64 : index
    %26 = vector.load %arg4[%c48, %c64_18] : memref<64x128xf32, #tpu.memory_space<vmem>>, vector<8x64xf32>
    tpu.vector_store %arg4[%c48, %c64_18], %25 {strides = array<i32>} : memref<64x128xf32, #tpu.memory_space<vmem>>, vector<8x64xf32>,
    %27 = arith.truncf %22 : vector<16x64xf32> to vector<16x64xbf16>
    %cst_19 = arith.constant dense<0.000000e+00> : vector<16x64xf32>
    %28 = tpu.matmul %27, %7, %cst_19 {dimension_numbers = #tpu.dot_dimension_numbers<[1], [0], [0], [1], [0, 0, 1, 1], [], []>} : vector<16x64xbf16>, vector<64x64xbf16>, vector<16x64xf32> -> vector<16x64xf32>
    %c32 = arith.constant 32 : index
    %c0_20 = arith.constant 0 : index
    %29 = vector.load %arg5[%c32, %c0_20] : memref<128x64xf32, #tpu.memory_space<vmem>>, vector<16x64xf32>
    %30 = arith.addf %28, %29 : vector<16x64xf32>
    %31 = math.tanh %30 : vector<16x64xf32>
    %32 = vector.extract_strided_slice %31 {offsets = [0, 0], sizes = [8, 64], strides = [1, 1]} : vector<16x64xf32> to vector<8x64xf32>
    %c16_21 = arith.constant 16 : index
    %c0_22 = arith.constant 0 : index
    %33 = vector.load %arg4[%c16_21, %c0_22] : memref<64x128xf32, #tpu.memory_space<vmem>>, vector<8x64xf32>
    tpu.vector_store %arg4[%c16_21, %c0_22], %32 {strides = array<i32>} : memref<64x128xf32, #tpu.memory_space<vmem>>, vector<8x64xf32>,
    %34 = vector.extract_strided_slice %31 {offsets = [8, 0], sizes = [8, 64], strides = [1, 1]} : vector<16x64xf32> to vector<8x64xf32>
    %c40 = arith.constant 40 : index
    %c64_23 = arith.constant 64 : index
    %35 = vector.load %arg4[%c40, %c64_23] : memref<64x128xf32, #tpu.memory_space<vmem>>, vector<8x64xf32>
    tpu.vector_store %arg4[%c40, %c64_23], %34 {strides = array<i32>} : memref<64x128xf32, #tpu.memory_space<vmem>>, vector<8x64xf32>,
    %36 = arith.truncf %31 : vector<16x64xf32> to vector<16x64xbf16>
    %cst_24 = arith.constant dense<0.000000e+00> : vector<16x64xf32>
    %37 = tpu.matmul %36, %7, %cst_24 {dimension_numbers = #tpu.dot_dimension_numbers<[1], [0], [0], [1], [0, 0, 1, 1], [], []>} : vector<16x64xbf16>, vector<64x64xbf16>, vector<16x64xf32> -> vector<16x64xf32>
    %c48_25 = arith.constant 48 : index
    %c0_26 = arith.constant 0 : index
    %38 = vector.load %arg5[%c48_25, %c0_26] : memref<128x64xf32, #tpu.memory_space<vmem>>, vector<16x64xf32>
    %39 = arith.addf %37, %38 : vector<16x64xf32>
    %40 = math.tanh %39 : vector<16x64xf32>
    %41 = vector.extract_strided_slice %40 {offsets = [0, 0], sizes = [8, 64], strides = [1, 1]} : vector<16x64xf32> to vector<8x64xf32>
    %c24 = arith.constant 24 : index
    %c0_27 = arith.constant 0 : index
    %42 = vector.load %arg4[%c24, %c0_27] : memref<64x128xf32, #tpu.memory_space<vmem>>, vector<8x64xf32>
    tpu.vector_store %arg4[%c24, %c0_27], %41 {strides = array<i32>} : memref<64x128xf32, #tpu.memory_space<vmem>>, vector<8x64xf32>,
    %43 = vector.extract_strided_slice %40 {offsets = [8, 0], sizes = [8, 64], strides = [1, 1]} : vector<16x64xf32> to vector<8x64xf32>
    %c32_28 = arith.constant 32 : index
    %c64_29 = arith.constant 64 : index
    %44 = vector.load %arg4[%c32_28, %c64_29] : memref<64x128xf32, #tpu.memory_space<vmem>>, vector<8x64xf32>
    tpu.vector_store %arg4[%c32_28, %c64_29], %43 {strides = array<i32>} : memref<64x128xf32, #tpu.memory_space<vmem>>, vector<8x64xf32>,
    %45 = arith.truncf %40 : vector<16x64xf32> to vector<16x64xbf16>
    %cst_30 = arith.constant dense<0.000000e+00> : vector<16x64xf32>
    %46 = tpu.matmul %45, %7, %cst_30 {dimension_numbers = #tpu.dot_dimension_numbers<[1], [0], [0], [1], [0, 0, 1, 1], [], []>} : vector<16x64xbf16>, vector<64x64xbf16>, vector<16x64xf32> -> vector<16x64xf32>
    %c64_31 = arith.constant 64 : index
    %c0_32 = arith.constant 0 : index
    %47 = vector.load %arg5[%c64_31, %c0_32] : memref<128x64xf32, #tpu.memory_space<vmem>>, vector<16x64xf32>
    %48 = arith.addf %46, %47 : vector<16x64xf32>
    %49 = math.tanh %48 : vector<16x64xf32>
    %50 = vector.extract_strided_slice %49 {offsets = [0, 0], sizes = [8, 64], strides = [1, 1]} : vector<16x64xf32> to vector<8x64xf32>
    %c32_33 = arith.constant 32 : index
    %c0_34 = arith.constant 0 : index
    %51 = vector.load %arg4[%c32_33, %c0_34] : memref<64x128xf32, #tpu.memory_space<vmem>>, vector<8x64xf32>
    tpu.vector_store %arg4[%c32_33, %c0_34], %50 {strides = array<i32>} : memref<64x128xf32, #tpu.memory_space<vmem>>, vector<8x64xf32>,
    %52 = vector.extract_strided_slice %49 {offsets = [8, 0], sizes = [8, 64], strides = [1, 1]} : vector<16x64xf32> to vector<8x64xf32>
    %c24_35 = arith.constant 24 : index
    %c64_36 = arith.constant 64 : index
    %53 = vector.load %arg4[%c24_35, %c64_36] : memref<64x128xf32, #tpu.memory_space<vmem>>, vector<8x64xf32>
    tpu.vector_store %arg4[%c24_35, %c64_36], %52 {strides = array<i32>} : memref<64x128xf32, #tpu.memory_space<vmem>>, vector<8x64xf32>,
    %54 = arith.truncf %49 : vector<16x64xf32> to vector<16x64xbf16>
    %cst_37 = arith.constant dense<0.000000e+00> : vector<16x64xf32>
    %55 = tpu.matmul %54, %7, %cst_37 {dimension_numbers = #tpu.dot_dimension_numbers<[1], [0], [0], [1], [0, 0, 1, 1], [], []>} : vector<16x64xbf16>, vector<64x64xbf16>, vector<16x64xf32> -> vector<16x64xf32>
    %c80 = arith.constant 80 : index
    %c0_38 = arith.constant 0 : index
    %56 = vector.load %arg5[%c80, %c0_38] : memref<128x64xf32, #tpu.memory_space<vmem>>, vector<16x64xf32>
    %57 = arith.addf %55, %56 : vector<16x64xf32>
    %58 = math.tanh %57 : vector<16x64xf32>
    %59 = vector.extract_strided_slice %58 {offsets = [0, 0], sizes = [8, 64], strides = [1, 1]} : vector<16x64xf32> to vector<8x64xf32>
    %c40_39 = arith.constant 40 : index
    %c0_40 = arith.constant 0 : index
    %60 = vector.load %arg4[%c40_39, %c0_40] : memref<64x128xf32, #tpu.memory_space<vmem>>, vector<8x64xf32>
    tpu.vector_store %arg4[%c40_39, %c0_40], %59 {strides = array<i32>} : memref<64x128xf32, #tpu.memory_space<vmem>>, vector<8x64xf32>,
    %61 = vector.extract_strided_slice %58 {offsets = [8, 0], sizes = [8, 64], strides = [1, 1]} : vector<16x64xf32> to vector<8x64xf32>
    %c16_41 = arith.constant 16 : index
    %c64_42 = arith.constant 64 : index
    %62 = vector.load %arg4[%c16_41, %c64_42] : memref<64x128xf32, #tpu.memory_space<vmem>>, vector<8x64xf32>
    tpu.vector_store %arg4[%c16_41, %c64_42], %61 {strides = array<i32>} : memref<64x128xf32, #tpu.memory_space<vmem>>, vector<8x64xf32>,
    %63 = arith.truncf %58 : vector<16x64xf32> to vector<16x64xbf16>
    %cst_43 = arith.constant dense<0.000000e+00> : vector<16x64xf32>
    %64 = tpu.matmul %63, %7, %cst_43 {dimension_numbers = #tpu.dot_dimension_numbers<[1], [0], [0], [1], [0, 0, 1, 1], [], []>} : vector<16x64xbf16>, vector<64x64xbf16>, vector<16x64xf32> -> vector<16x64xf32>
    %c96 = arith.constant 96 : index
    %c0_44 = arith.constant 0 : index
    %65 = vector.load %arg5[%c96, %c0_44] : memref<128x64xf32, #tpu.memory_space<vmem>>, vector<16x64xf32>
    %66 = arith.addf %64, %65 : vector<16x64xf32>
    %67 = math.tanh %66 : vector<16x64xf32>
    %68 = vector.extract_strided_slice %67 {offsets = [0, 0], sizes = [8, 64], strides = [1, 1]} : vector<16x64xf32> to vector<8x64xf32>
    %c48_45 = arith.constant 48 : index
    %c0_46 = arith.constant 0 : index
    %69 = vector.load %arg4[%c48_45, %c0_46] : memref<64x128xf32, #tpu.memory_space<vmem>>, vector<8x64xf32>
    tpu.vector_store %arg4[%c48_45, %c0_46], %68 {strides = array<i32>} : memref<64x128xf32, #tpu.memory_space<vmem>>, vector<8x64xf32>,
    %70 = vector.extract_strided_slice %67 {offsets = [8, 0], sizes = [8, 64], strides = [1, 1]} : vector<16x64xf32> to vector<8x64xf32>
    %c8_47 = arith.constant 8 : index
    %c64_48 = arith.constant 64 : index
    %71 = vector.load %arg4[%c8_47, %c64_48] : memref<64x128xf32, #tpu.memory_space<vmem>>, vector<8x64xf32>
    tpu.vector_store %arg4[%c8_47, %c64_48], %70 {strides = array<i32>} : memref<64x128xf32, #tpu.memory_space<vmem>>, vector<8x64xf32>,
    %72 = arith.truncf %67 : vector<16x64xf32> to vector<16x64xbf16>
    %cst_49 = arith.constant dense<0.000000e+00> : vector<16x64xf32>
    %73 = tpu.matmul %72, %7, %cst_49 {dimension_numbers = #tpu.dot_dimension_numbers<[1], [0], [0], [1], [0, 0, 1, 1], [], []>} : vector<16x64xbf16>, vector<64x64xbf16>, vector<16x64xf32> -> vector<16x64xf32>
    %c112 = arith.constant 112 : index
    %c0_50 = arith.constant 0 : index
    %74 = vector.load %arg5[%c112, %c0_50] : memref<128x64xf32, #tpu.memory_space<vmem>>, vector<16x64xf32>
    %75 = arith.addf %73, %74 : vector<16x64xf32>
    %76 = math.tanh %75 : vector<16x64xf32>
    %77 = vector.extract_strided_slice %76 {offsets = [0, 0], sizes = [8, 64], strides = [1, 1]} : vector<16x64xf32> to vector<8x64xf32>
    %c56_51 = arith.constant 56 : index
    %c0_52 = arith.constant 0 : index
    %78 = vector.load %arg4[%c56_51, %c0_52] : memref<64x128xf32, #tpu.memory_space<vmem>>, vector<8x64xf32>
    tpu.vector_store %arg4[%c56_51, %c0_52], %77 {strides = array<i32>} : memref<64x128xf32, #tpu.memory_space<vmem>>, vector<8x64xf32>,
    %79 = vector.extract_strided_slice %76 {offsets = [8, 0], sizes = [8, 64], strides = [1, 1]} : vector<16x64xf32> to vector<8x64xf32>
    %c0_53 = arith.constant 0 : index
    %c64_54 = arith.constant 64 : index
    %80 = vector.load %arg4[%c0_53, %c64_54] : memref<64x128xf32, #tpu.memory_space<vmem>>, vector<8x64xf32>
    tpu.vector_store %arg4[%c0_53, %c64_54], %79 {strides = array<i32>} : memref<64x128xf32, #tpu.memory_space<vmem>>, vector<8x64xf32>,
    return
  }
}

</mosaic_0001>

<llo_original>
// kernel: bidirectional_forward.1
$region0: #{bidirectional_forward.1}
  #allocation0 [shape = 'u32[]', space=smem, size = 0x4, offset = 0x4, fixed_abs, tag = 'smem constant byte address 0x4 - core index']
  #allocation1 [shape = 'u32[72,128]{1,0:T(1,128)}', space=vmem, size = 0x9000, scoped, tag = 'internal scratch']
  #allocation2 [shape = 'f32[128,64]{1,0:T(8,128)}', space=vmem, size = 0x10000, scoped, tag = 'scratch operand']
  %s0 = inlined_call_operand.vmem [shape: bf16[128,32], index: 0, kind: input, shape index: {}]
  %s1 = inlined_call_operand.vmem [shape: bf16[32,64], index: 1, kind: input, shape index: {}]
  %s2 = inlined_call_operand.vmem [shape: bf16[64,64], index: 2, kind: input, shape index: {}]
  %s3 = inlined_call_operand.vmem [shape: f32[1,64], index: 3, kind: input, shape index: {}]
  %s4 = inlined_call_operand.hbm [shape: f32[64,128], index: 4, kind: output, shape index: {}]
  %s5 = sld [smem:[#allocation0]]
  $region26: #{bidirectional_forward.1} parent=0
    _
  %s7 = ssub.s32 1, %s5
  %s8 = scalar_select 0, %s7, %s5
  $region1: #{bidirectional_forward.1} parent=0
    #allocation3 [shape = 'u8[32768]{0}', space=vmem, size = 0x8000, scoped, tag = 'output window, operand 0, single buffered']
    #allocation4 [shape = 's32[1]{0}', space=sflag, size = 0x4, scoped, tag = 'scoped memory for bidirectional_forward.1']
    %9 = vsyncpa [#allocation4], 0
    // Predicated region
    $region2: #{bidirectional_forward.1} parent=1 // pred_check
      _
    $region3: #{bidirectional_forward.1} parent=1 // pred_check_branch
      %11 = sbr.rel (0) target = $region5
    $region4: #{bidirectional_forward.1} parent=1 // pred_region
      _
    $region5: #{bidirectional_forward.1} parent=1 // pred_fallthru
      _
    // Predicated region
    $region6: #{bidirectional_forward.1} parent=1 // pred_check
      _
    $region7: #{bidirectional_forward.1} parent=1 // pred_check_branch
      %13 = sbr.rel (0) target = $region9
    $region8: #{bidirectional_forward.1} parent=1 // pred_region
      _
    $region9: #{bidirectional_forward.1} parent=1 // pred_fallthru
      _
    // Predicated region
    $region10: #{bidirectional_forward.1} parent=1 // pred_check
      _
    $region11: #{bidirectional_forward.1} parent=1 // pred_check_branch
      %15 = sbr.rel (0) target = $region13
    $region12: #{bidirectional_forward.1} parent=1 // pred_region
      _
    $region13: #{bidirectional_forward.1} parent=1 // pred_fallthru
      _
    // Predicated region
    $region14: #{bidirectional_forward.1} parent=1 // pred_check
      _
    $region15: #{bidirectional_forward.1} parent=1 // pred_check_branch
      %17 = sbr.rel (0) target = $region17
    $region16: #{bidirectional_forward.1} parent=1 // pred_region
      _
    $region17: #{bidirectional_forward.1} parent=1 // pred_fallthru
      _
    %v19 = vld [vmem:[%s0] sm:$0xf]
    %v20 = vld [vmem:[%s0 + $0x4] sm:$0xf]
    %v21 = vld [vmem:[%s0 + $0x8] sm:$0xf]
    %v22 = vld [vmem:[%s0 + $0xc] sm:$0xf]
    %v23 = vld [vmem:[%s0 + $0x10] sm:$0xf]
    %v24 = vld [vmem:[%s0 + $0x14] sm:$0xf]
    %v25 = vld [vmem:[%s0 + $0x18] sm:$0xf]
    %v26 = vld [vmem:[%s0 + $0x1c] sm:$0xf]
    %v27 = vld [vmem:[%s0 + $0x20] sm:$0xf]
    %v28 = vld [vmem:[%s0 + $0x24] sm:$0xf]
    %v29 = vld [vmem:[%s0 + $0x28] sm:$0xf]
    %v30 = vld [vmem:[%s0 + $0x2c] sm:$0xf]
    %v31 = vld [vmem:[%s0 + $0x30] sm:$0xf]
    %v32 = vld [vmem:[%s0 + $0x34] sm:$0xf]
    %v33 = vld [vmem:[%s0 + $0x38] sm:$0xf]
    %v34 = vld [vmem:[%s0 + $0x3c] sm:$0xf]
    %v35 = vld [vmem:[%s1] sm:$0xf]
    %v36 = vld [vmem:[%s1 + $0x4] sm:$0xf]
    %v37 = vld [vmem:[%s1 + $0x8] sm:$0xf]
    %v38 = vld [vmem:[%s1 + $0xc] sm:$0xf]
    %v39 = vld [vmem:[%s3] sm:$0x1]
    %v41 = vperm.slane %v39, 0
    %v59 = vunpack.c.l.b16 %v19
    %v60 = vunpack.c.l.b16 %v20
    %v61 = vunpack.c.l.b16 %v21
    %v62 = vunpack.c.l.b16 %v22
    %v63 = vunpack.c.l.b16 %v23
    %v64 = vunpack.c.l.b16 %v24
    %v65 = vunpack.c.l.b16 %v25
    %v66 = vunpack.c.l.b16 %v26
    %v67 = vunpack.c.l.b16 %v27
    %v68 = vunpack.c.l.b16 %v28
    %v69 = vunpack.c.l.b16 %v29
    %v70 = vunpack.c.l.b16 %v30
    %v71 = vunpack.c.l.b16 %v31
    %v72 = vunpack.c.l.b16 %v32
    %v73 = vunpack.c.l.b16 %v33
    %v74 = vunpack.c.l.b16 %v34
    %v75 = vpack.c.b16 %v60, %v59
    %v76 = vpack.c.b16 %v62, %v61
    %v77 = vpack.c.b16 %v64, %v63
    %v78 = vpack.c.b16 %v66, %v65
    %v79 = vpack.c.b16 %v68, %v67
    %v80 = vpack.c.b16 %v70, %v69
    %v81 = vpack.c.b16 %v72, %v71
    %v82 = vpack.c.b16 %v74, %v73
    %v87 = vunpack.c.l.b16 %v35
    %v88 = vunpack.c.l.b16 %v36
    %v89 = vunpack.c.l.b16 %v37
    %v90 = vunpack.c.l.b16 %v38
    %v91 = vpack.c.b16 %v88, %v87
    %v92 = vpack.c.b16 %v90, %v89
    %vm95 = vcmask 261120
    %v97 = vsel %vm95, %v75, 0
    %v100 = vsel %vm95, %v76, 0
    %v103 = vsel %vm95, %v77, 0
    %v106 = vsel %vm95, %v78, 0
    %v109 = vsel %vm95, %v79, 0
    %v112 = vsel %vm95, %v80, 0
    %v115 = vsel %vm95, %v81, 0
    %v118 = vsel %vm95, %v82, 0
    %120 = vmatpush.bf16.msra.mxu0 0
    %121 = vmatpush.bf16.msra.mxu0 0
    %122 = vmatpush.bf16.msra.mxu0 0
    %123 = vmatpush.bf16.msra.mxu0 0
    %124 = vmatpush.bf16.msra.mxu0 0
    %125 = vmatpush.bf16.msra.mxu0 0
    %126 = vmatpush.bf16.msra.mxu0 %v92
    %127 = vmatpush.bf16.msra.mxu0 %v91
    %128 = vmatmul.bf16.gmra.mxu0 %v97
    %v129 = vpop.f32.mrf.mxu0
    %v130 = vadd.f32 %v41, %v129
    %v131 = vpop.f32.mrf.mxu0
    %v132 = vadd.f32 %v41, %v131
    %133 = vmatmul.bf16.gmra.mxu0 %v100
    %v134 = vpop.f32.mrf.mxu0
    %v135 = vadd.f32 %v41, %v134
    %v136 = vpop.f32.mrf.mxu0
    %v137 = vadd.f32 %v41, %v136
    %138 = vmatmul.bf16.gmra.mxu0 %v103
    %v139 = vpop.f32.mrf.mxu0
    %v140 = vadd.f32 %v41, %v139
    %v141 = vpop.f32.mrf.mxu0
    %v142 = vadd.f32 %v41, %v141
    %143 = vmatmul.bf16.gmra.mxu0 %v106
    %v144 = vpop.f32.mrf.mxu0
    %v145 = vadd.f32 %v41, %v144
    %v146 = vpop.f32.mrf.mxu0
    %v147 = vadd.f32 %v41, %v146
    %148 = vmatmul.bf16.gmra.mxu0 %v109
    %v149 = vpop.f32.mrf.mxu0
    %v150 = vadd.f32 %v41, %v149
    %v151 = vpop.f32.mrf.mxu0
    %v152 = vadd.f32 %v41, %v151
    %153 = vmatmul.bf16.gmra.mxu0 %v112
    %v154 = vpop.f32.mrf.mxu0
    %v155 = vadd.f32 %v41, %v154
    %v156 = vpop.f32.mrf.mxu0
    %v157 = vadd.f32 %v41, %v156
    %158 = vmatmul.bf16.gmra.mxu0 %v115
    %v159 = vpop.f32.mrf.mxu0
    %v160 = vadd.f32 %v41, %v159
    %v161 = vpop.f32.mrf.mxu0
    %v162 = vadd.f32 %v41, %v161
    %163 = vmatmul.bf16.gmra.mxu0 %v118
    %v164 = vpop.f32.mrf.mxu0
    %v165 = vadd.f32 %v41, %v164
    %v166 = vpop.f32.mrf.mxu0
    %v167 = vadd.f32 %v41, %v166
    %168 = vdwg.mxu0
    %vm169 = vcmask 523264
    %170 = vst.msk [vmem:[#allocation2] sm:$0xff] %vm169, %v130
    %171 = vst.msk [vmem:[#allocation2 + $0x8] sm:$0xff] %vm169, %v132
    %172 = vst.msk [vmem:[#allocation2 + $0x10] sm:$0xff] %vm169, %v135
    %173 = vst.msk [vmem:[#allocation2 + $0x18] sm:$0xff] %vm169, %v137
    %174 = vst.msk [vmem:[#allocation2 + $0x20] sm:$0xff] %vm169, %v140
    %175 = vst.msk [vmem:[#allocation2 + $0x28] sm:$0xff] %vm169, %v142
    %176 = vst.msk [vmem:[#allocation2 + $0x30] sm:$0xff] %vm169, %v145
    %177 = vst.msk [vmem:[#allocation2 + $0x38] sm:$0xff] %vm169, %v147
    %178 = vst.msk [vmem:[#allocation2 + $0x40] sm:$0xff] %vm169, %v150
    %179 = vst.msk [vmem:[#allocation2 + $0x48] sm:$0xff] %vm169, %v152
    %180 = vst.msk [vmem:[#allocation2 + $0x50] sm:$0xff] %vm169, %v155
    %181 = vst.msk [vmem:[#allocation2 + $0x58] sm:$0xff] %vm169, %v157
    %182 = vst.msk [vmem:[#allocation2 + $0x60] sm:$0xff] %vm169, %v160
    %183 = vst.msk [vmem:[#allocation2 + $0x68] sm:$0xff] %vm169, %v162
    %184 = vst.msk [vmem:[#allocation2 + $0x70] sm:$0xff] %vm169, %v165
    %185 = vst.msk [vmem:[#allocation2 + $0x78] sm:$0xff] %vm169, %v167
    %v186 = vld [vmem:[%s2] sm:$0xf]
    %v187 = vld [vmem:[%s2 + $0x4] sm:$0xf]
    %v188 = vld [vmem:[%s2 + $0x8] sm:$0xf]
    %v189 = vld [vmem:[%s2 + $0xc] sm:$0xf]
    %v190 = vld [vmem:[%s2 + $0x10] sm:$0xf]
    %v191 = vld [vmem:[%s2 + $0x14] sm:$0xf]
    %v192 = vld [vmem:[%s2 + $0x18] sm:$0xf]
    %v193 = vld [vmem:[%s2 + $0x1c] sm:$0xf]
    %v194 = vld [vmem:[#allocation2] sm:$0xff]
    %v195 = vld [vmem:[#allocation2 + $0x8] sm:$0xff]
    %v204 = vunpack.c.l.b16 %v186
    %v205 = vunpack.c.l.b16 %v187
    %v206 = vunpack.c.l.b16 %v188
    %v207 = vunpack.c.l.b16 %v189
    %v208 = vunpack.c.l.b16 %v190
    %v209 = vunpack.c.l.b16 %v191
    %v210 = vunpack.c.l.b16 %v192
    %v211 = vunpack.c.l.b16 %v193
    %v212 = vpack.c.b16 %v205, %v204
    %v213 = vpack.c.b16 %v207, %v206
    %v214 = vpack.c.b16 %v209, %v208
    %v215 = vpack.c.b16 %v211, %v210
    %v221 = vsel %vm169, 0, 0
    %223 = vmatpush.bf16.msra.mxu0 0
    %224 = vmatpush.bf16.msra.mxu0 0
    %225 = vmatpush.bf16.msra.mxu0 0
    %226 = vmatpush.bf16.msra.mxu0 0
    %227 = vmatpush.bf16.msra.mxu0 %v215
    %228 = vmatpush.bf16.msra.mxu0 %v214
    %229 = vmatpush.bf16.msra.mxu0 %v213
    %230 = vmatpush.bf16.msra.mxu0 %v212
    %231 = vmatmul.bf16.gmra.mxu0 %v221
    %v232 = vpop.f32.mrf.mxu0
    %v233 = vadd.f32 %v194, %v232
    %v234 = vpop.f32.mrf.mxu0
    %v235 = vadd.f32 %v195, %v234
    %236 = vdwg.mxu0
    %v237 = vtanh.pop %v233
    %v238 = vtanh.pop %v235
    %239 = vst.msk [vmem:[#allocation3] sm:$0xff] %vm169, %v237
    %241 = vrot.lane.b32.xlu0 %v238, 64
    %v242 = vpop.permute.xlu0 %241
    %vm244 = vcmask 1048064
    %245 = vst.msk [vmem:[#allocation3 + $0x38] sm:$0xff] %vm244, %v242
    %v246 = vpack.c.bf16 %v238, %v237
    %v247 = vld [vmem:[#allocation2 + $0x10] sm:$0xff]
    %v248 = vld [vmem:[#allocation2 + $0x18] sm:$0xff]
    %v250 = vsel %vm169, %v246, 0
    %252 = vmatpush.bf16.msra.mxu0 0
    %253 = vmatpush.bf16.msra.mxu0 0
    %254 = vmatpush.bf16.msra.mxu0 0
    %255 = vmatpush.bf16.msra.mxu0 0
    %256 = vmatpush.bf16.msra.mxu0 %v215
    %257 = vmatpush.bf16.msra.mxu0 %v214
    %258 = vmatpush.bf16.msra.mxu0 %v213
    %259 = vmatpush.bf16.msra.mxu0 %v212
    %260 = vmatmul.bf16.gmra.mxu0 %v250
    %v261 = vpop.f32.mrf.mxu0
    %v262 = vadd.f32 %v247, %v261
    %v263 = vpop.f32.mrf.mxu0
    %v264 = vadd.f32 %v248, %v263
    %265 = vdwg.mxu0
    %v266 = vtanh.pop %v262
    %v267 = vtanh.pop %v264
    %268 = vst.msk [vmem:[#allocation3 + $0x8] sm:$0xff] %vm169, %v266
    %270 = vrot.lane.b32.xlu0 %v267, 64
    %v271 = vpop.permute.xlu0 %270
    %273 = vst.msk [vmem:[#allocation3 + $0x30] sm:$0xff] %vm244, %v271
    %v274 = vpack.c.bf16 %v267, %v266
    %v275 = vld [vmem:[#allocation2 + $0x20] sm:$0xff]
    %v276 = vld [vmem:[#allocation2 + $0x28] sm:$0xff]
    %v278 = vsel %vm169, %v274, 0
    %280 = vmatpush.bf16.msra.mxu0 0
    %281 = vmatpush.bf16.msra.mxu0 0
    %282 = vmatpush.bf16.msra.mxu0 0
    %283 = vmatpush.bf16.msra.mxu0 0
    %284 = vmatpush.bf16.msra.mxu0 %v215
    %285 = vmatpush.bf16.msra.mxu0 %v214
    %286 = vmatpush.bf16.msra.mxu0 %v213
    %287 = vmatpush.bf16.msra.mxu0 %v212
    %288 = vmatmul.bf16.gmra.mxu0 %v278
    %v289 = vpop.f32.mrf.mxu0
    %v290 = vadd.f32 %v275, %v289
    %v291 = vpop.f32.mrf.mxu0
    %v292 = vadd.f32 %v276, %v291
    %293 = vdwg.mxu0
    %v294 = vtanh.pop %v290
    %v295 = vtanh.pop %v292
    %296 = vst.msk [vmem:[#allocation3 + $0x10] sm:$0xff] %vm169, %v294
    %298 = vrot.lane.b32.xlu0 %v295, 64
    %v299 = vpop.permute.xlu0 %298
    %301 = vst.msk [vmem:[#allocation3 + $0x28] sm:$0xff] %vm244, %v299
    %v302 = vpack.c.bf16 %v295, %v294
    %v303 = vld [vmem:[#allocation2 + $0x30] sm:$0xff]
    %v304 = vld [vmem:[#allocation2 + $0x38] sm:$0xff]
    %v306 = vsel %vm169, %v302, 0
    %308 = vmatpush.bf16.msra.mxu0 0
    %309 = vmatpush.bf16.msra.mxu0 0
    %310 = vmatpush.bf16.msra.mxu0 0
    %311 = vmatpush.bf16.msra.mxu0 0
    %312 = vmatpush.bf16.msra.mxu0 %v215
    %313 = vmatpush.bf16.msra.mxu0 %v214
    %314 = vmatpush.bf16.msra.mxu0 %v213
    %315 = vmatpush.bf16.msra.mxu0 %v212
    %316 = vmatmul.bf16.gmra.mxu0 %v306
    %v317 = vpop.f32.mrf.mxu0
    %v318 = vadd.f32 %v303, %v317
    %v319 = vpop.f32.mrf.mxu0
    %v320 = vadd.f32 %v304, %v319
    %321 = vdwg.mxu0
    %v322 = vtanh.pop %v318
    %v323 = vtanh.pop %v320
    %324 = vst.msk [vmem:[#allocation3 + $0x18] sm:$0xff] %vm169, %v322
    %326 = vrot.lane.b32.xlu0 %v323, 64
    %v327 = vpop.permute.xlu0 %326
    %329 = vst.msk [vmem:[#allocation3 + $0x20] sm:$0xff] %vm244, %v327
    %v330 = vpack.c.bf16 %v323, %v322
    %v331 = vld [vmem:[#allocation2 + $0x40] sm:$0xff]
    %v332 = vld [vmem:[#allocation2 + $0x48] sm:$0xff]
    %v334 = vsel %vm169, %v330, 0
    %336 = vmatpush.bf16.msra.mxu0 0
    %337 = vmatpush.bf16.msra.mxu0 0
    %338 = vmatpush.bf16.msra.mxu0 0
    %339 = vmatpush.bf16.msra.mxu0 0
    %340 = vmatpush.bf16.msra.mxu0 %v215
    %341 = vmatpush.bf16.msra.mxu0 %v214
    %342 = vmatpush.bf16.msra.mxu0 %v213
    %343 = vmatpush.bf16.msra.mxu0 %v212
    %344 = vmatmul.bf16.gmra.mxu0 %v334
    %v345 = vpop.f32.mrf.mxu0
    %v346 = vadd.f32 %v331, %v345
    %v347 = vpop.f32.mrf.mxu0
    %v348 = vadd.f32 %v332, %v347
    %349 = vdwg.mxu0
    %v350 = vtanh.pop %v346
    %v351 = vtanh.pop %v348
    %352 = vst.msk [vmem:[#allocation3 + $0x20] sm:$0xff] %vm169, %v350
    %354 = vrot.lane.b32.xlu0 %v351, 64
    %v355 = vpop.permute.xlu0 %354
    %357 = vst.msk [vmem:[#allocation3 + $0x18] sm:$0xff] %vm244, %v355
    %v358 = vpack.c.bf16 %v351, %v350
    %v359 = vld [vmem:[#allocation2 + $0x50] sm:$0xff]
    %v360 = vld [vmem:[#allocation2 + $0x58] sm:$0xff]
    %v362 = vsel %vm169, %v358, 0
    %364 = vmatpush.bf16.msra.mxu0 0
    %365 = vmatpush.bf16.msra.mxu0 0
    %366 = vmatpush.bf16.msra.mxu0 0
    %367 = vmatpush.bf16.msra.mxu0 0
    %368 = vmatpush.bf16.msra.mxu0 %v215
    %369 = vmatpush.bf16.msra.mxu0 %v214
    %370 = vmatpush.bf16.msra.mxu0 %v213
    %371 = vmatpush.bf16.msra.mxu0 %v212
    %372 = vmatmul.bf16.gmra.mxu0 %v362
    %v373 = vpop.f32.mrf.mxu0
    %v374 = vadd.f32 %v359, %v373
    %v375 = vpop.f32.mrf.mxu0
    %v376 = vadd.f32 %v360, %v375
    %377 = vdwg.mxu0
    %v378 = vtanh.pop %v374
    %v379 = vtanh.pop %v376
    %380 = vst.msk [vmem:[#allocation3 + $0x28] sm:$0xff] %vm169, %v378
    %382 = vrot.lane.b32.xlu0 %v379, 64
    %v383 = vpop.permute.xlu0 %382
    %385 = vst.msk [vmem:[#allocation3 + $0x10] sm:$0xff] %vm244, %v383
    %v386 = vpack.c.bf16 %v379, %v378
    %v387 = vld [vmem:[#allocation2 + $0x60] sm:$0xff]
    %v388 = vld [vmem:[#allocation2 + $0x68] sm:$0xff]
    %v390 = vsel %vm169, %v386, 0
    %392 = vmatpush.bf16.msra.mxu0 0
    %393 = vmatpush.bf16.msra.mxu0 0
    %394 = vmatpush.bf16.msra.mxu0 0
    %395 = vmatpush.bf16.msra.mxu0 0
    %396 = vmatpush.bf16.msra.mxu0 %v215
    %397 = vmatpush.bf16.msra.mxu0 %v214
    %398 = vmatpush.bf16.msra.mxu0 %v213
    %399 = vmatpush.bf16.msra.mxu0 %v212
    %400 = vmatmul.bf16.gmra.mxu0 %v390
    %v401 = vpop.f32.mrf.mxu0
    %v402 = vadd.f32 %v387, %v401
    %v403 = vpop.f32.mrf.mxu0
    %v404 = vadd.f32 %v388, %v403
    %405 = vdwg.mxu0
    %v406 = vtanh.pop %v402
    %v407 = vtanh.pop %v404
    %408 = vst.msk [vmem:[#allocation3 + $0x30] sm:$0xff] %vm169, %v406
    %410 = vrot.lane.b32.xlu0 %v407, 64
    %v411 = vpop.permute.xlu0 %410
    %413 = vst.msk [vmem:[#allocation3 + $0x8] sm:$0xff] %vm244, %v411
    %v414 = vpack.c.bf16 %v407, %v406
    %v415 = vld [vmem:[#allocation2 + $0x70] sm:$0xff]
    %v416 = vld [vmem:[#allocation2 + $0x78] sm:$0xff]
    %v418 = vsel %vm169, %v414, 0
    %420 = vmatpush.bf16.msra.mxu0 0
    %421 = vmatpush.bf16.msra.mxu0 0
    %422 = vmatpush.bf16.msra.mxu0 0
    %423 = vmatpush.bf16.msra.mxu0 0
    %424 = vmatpush.bf16.msra.mxu0 %v215
    %425 = vmatpush.bf16.msra.mxu0 %v214
    %426 = vmatpush.bf16.msra.mxu0 %v213
    %427 = vmatpush.bf16.msra.mxu0 %v212
    %428 = vmatmul.bf16.gmra.mxu0 %v418
    %v429 = vpop.f32.mrf.mxu0
    %v430 = vadd.f32 %v415, %v429
    %v431 = vpop.f32.mrf.mxu0
    %v432 = vadd.f32 %v416, %v431
    %433 = vdwg.mxu0
    %v434 = vtanh.pop %v430
    %v435 = vtanh.pop %v432
    %436 = vst.msk [vmem:[#allocation3 + $0x38] sm:$0xff] %vm169, %v434
    %438 = vrot.lane.b32.xlu0 %v435, 64
    %v439 = vpop.permute.xlu0 %438
    %441 = vst.msk [vmem:[#allocation3] sm:$0xff] %vm244, %v439
    // Predicated region
    $region18: #{bidirectional_forward.1} parent=1 // pred_check
      _
    $region19: #{bidirectional_forward.1} parent=1 // pred_check_branch
      %443 = sbr.rel (0) target = $region21
    $region20: #{bidirectional_forward.1} parent=1 // pred_region
      %445 = vsyncadd [#allocation4], 0
      %s446 = sshll.u32 [#allocation3], 4
      %s447 = int_to_ptr.vmem [resolvable:$true] %s446
      %s448 = sshll.u32 %s4, 4
      %s449 = int_to_ptr.hbm [resolvable:$true] %s448
      %454 = dma.vmem_to_hbm [thread:$0]  %s447, 1024, %s449, [#allocation4], 128, 128, 8
    $region21: #{bidirectional_forward.1} parent=1 // pred_fallthru
      _
    // Predicated region
    $region22: #{bidirectional_forward.1} parent=1 // pred_check
      _
    $region23: #{bidirectional_forward.1} parent=1 // pred_check_branch
      %456 = sbr.rel (0) target = $region25
    $region24: #{bidirectional_forward.1} parent=1 // pred_region
      %458 = dma.done [#allocation4], 1024
    $region25: #{bidirectional_forward.1} parent=1 // pred_fallthru
      _
    %459 = vsyncpa [#allocation4], 1

</llo_original>
